<compile_context>
chip_gen: v5e
topology: v5e:2x2
jax: 0.10.0
libtpu: 0.0.40
codegen_flags: <defaults>
</compile_context>

<pallas_src>
import functools

import numpy as np
import jax
import jax.numpy as jnp
from jax import lax
from jax.experimental import pallas as pl
from jax.experimental.pallas import tpu as pltpu


# --------------------------------------------------------------------------- #
# small helpers
# --------------------------------------------------------------------------- #
def _bilinear_matrix(n_in, n_out):
    """Interpolation matrix of Upsample(scale_factor, 'bilinear', align_corners=True)."""
    A = np.zeros((n_out, n_in), np.float32)
    if n_in == 1:
        A[:, 0] = 1.0
        return A
    scale = (n_in - 1) / (n_out - 1)
    for i in range(n_out):
        src = i * scale
        i0 = min(int(np.floor(src)), n_in - 1)
        i1 = min(i0 + 1, n_in - 1)
        w1 = np.float32(src - i0)
        A[i, i0] += np.float32(1.0) - w1
        A[i, i1] += w1
    return A


def _nearest_indices(n_in, n_out):
    """Source indices used by F.interpolate(mode='nearest')."""
    return np.clip(np.floor(np.arange(n_out) * (n_in / n_out)).astype(np.int32),
                   0, n_in - 1)


def _round_up(x, m):
    return -(-x // m) * m


def _pad_lanes(a, n):
    """Zero-pad the last (lane) dim of `a` to width n."""
    if a.shape[-1] == n:
        return a
    pad = [(0, 0)] * (a.ndim - 1) + [(0, n - a.shape[-1])]
    return jnp.pad(a, pad)


def _vmem_budget_bytes():
    """Generation-aware VMEM budget (v5e/v6e: 128 MiB physical, v7x: 64 MiB)."""
    try:
        cap = int(pltpu.get_tpu_info().vmem_capacity_bytes)
    except Exception:
        cap = 64 * 1024 * 1024
    return max(32 * 1024 * 1024, min(cap * 3 // 4, 100 * 1024 * 1024))


# ---- probe: does this build honour pl.Buffered(1) on pallas_call specs? ---- #
_SINGLE_BUFFER_OK = None


def _probe_kernel(x_ref, o_ref):
    o_ref[...] = x_ref[...] + 1.0


def _single_buffer_supported():
    """Probe (once) whether pipeline_mode=pl.Buffered(1) works for grid-invariant
    pallas_call operands; fall back to default double-buffering otherwise."""
    global _SINGLE_BUFFER_OK
    if _SINGLE_BUFFER_OK is not None:
        return _SINGLE_BUFFER_OK
    try:
        spec = pl.BlockSpec((8, 128), lambda i: (0, 0),
                            pipeline_mode=pl.Buffered(1))
        out = pl.pallas_call(
            _probe_kernel,
            out_shape=jax.ShapeDtypeStruct((8, 128), jnp.float32),
            grid_spec=pltpu.PrefetchScalarGridSpec(
                num_scalar_prefetch=0, grid=(2,),
                in_specs=[spec],
                out_specs=pl.BlockSpec((8, 128), lambda i: (0, 0))),
        )(jnp.zeros((8, 128), jnp.float32))
        jax.block_until_ready(out)
        _SINGLE_BUFFER_OK = bool(jnp.all(out == 1.0))
    except Exception:
        _SINGLE_BUFFER_OK = False
    return _SINGLE_BUFFER_OK


def _const_spec(block_shape, index_map, single_buffer):
    """BlockSpec for a grid-invariant operand; single-buffer it when supported."""
    if single_buffer:
        return pl.BlockSpec(block_shape, index_map, pipeline_mode=pl.Buffered(1))
    return pl.BlockSpec(block_shape, index_map)


def _pick_tile_h(h_out, rep_h, ws, fits):
    """Largest legal output-row tile whose (two-kernel) VMEM footprint fits."""
    cands = []
    for th in range(h_out, 0, -1):
        if h_out % th or th % rep_h:
            continue
        if h_out // th > 1:
            if th % 8:
                continue
            if ws is not None and ((th // rep_h) * ws) % 8:
                continue
        cands.append(th)
    for th in cands:                       # descending: largest first
        if fits(th):
            return th
    return cands[-1]                       # smallest legal tile as a fallback


# --------------------------------------------------------------------------- #
# kernel A: bilinear x4 upsample + 3x3 conv (padding=1), one output-row tile
# --------------------------------------------------------------------------- #
def _upsample_conv_kernel(x_ref, ahp_ref, m_ref, o_ref, *, tile_h):
    # x_ref  : (1, H, W*Cin)         bf16
    # ahp_ref: (1, tile_h+2, H)      bf16  zero-padded row-interp window
    # m_ref  : (3, W*Cin, Wout*dim)  bf16  width-interp * conv * BN1-scale taps
    x2d = x_ref[0]
    ahp = ahp_ref[0]
    # bilinear row-interp for this tile's (tile_h + 2) rows, computed ONCE
    t_win = jnp.dot(ahp, x2d, preferred_element_type=jnp.float32)
    t_win = t_win.astype(jnp.bfloat16)                       # (tile_h+2, W*Cin)
    # three K-block dots (one per conv height tap) accumulate on the MXU;
    # no concatenated (tile_h, 3*W*Cin) VMEM copy is materialised.
    conv = jnp.dot(t_win[0:tile_h], m_ref[0], preferred_element_type=jnp.float32)
    conv = conv + jnp.dot(t_win[1:tile_h + 1], m_ref[1],
                          preferred_element_type=jnp.float32)
    conv = conv + jnp.dot(t_win[2:tile_h + 2], m_ref[2],
                          preferred_element_type=jnp.float32)
    o_ref[0] = conv.astype(jnp.bfloat16)                     # (tile_h, Wout*dim)


# --------------------------------------------------------------------------- #
# kernel B: BN1-shift + ReLU -> 1x1 conv (BN2 folded) -> +bias -> +residual -> ReLU
#           in (pixels, channels) layout
# --------------------------------------------------------------------------- #
def _pointwise_residual_kernel(mid_ref, b1_ref, w1_ref, bo_ref, *rest,
                               rep_h, rep_w, ws, residual):
    o_ref = rest[-1]
    cout = w1_ref.shape[1]
    npx = mid_ref.shape[1]                                   # tile_h * Wout pixels

    y = mid_ref[0].astype(jnp.float32)                       # (npx, dim)
    y = jnp.maximum(y + b1_ref[...], 0.0)                    # BN1 shift + ReLU
    z = jnp.dot(y.astype(jnp.bfloat16), w1_ref[...],
                preferred_element_type=jnp.float32)           # 1x1 conv * BN2 scale
    z = z + bo_ref[...]                                       # BN2 shift (+ up bias)

    if residual:
        skip_ref, wup_ref = rest[0], rest[1]
        sk = skip_ref[0]                                      # (hs_t*ws, Sd) bf16
        hs_t = sk.shape[0] // ws
        up = jnp.dot(sk, wup_ref[...], preferred_element_type=jnp.float32)
        # nearest upsample = exact integer repeat, done in registers
        up = up.reshape(hs_t * ws, 1, cout)
        up = jnp.broadcast_to(up, (hs_t * ws, rep_w, cout))
        up = up.reshape(hs_t * ws * rep_w, cout)
        up = up.reshape(hs_t, 1, ws * rep_w, cout)
        up = jnp.broadcast_to(up, (hs_t, rep_h, ws * rep_w, cout))
        z = z + up.reshape(npx, cout)

    o_ref[0] = jnp.maximum(z, 0.0).astype(o_ref.dtype)


# --------------------------------------------------------------------------- #
# wrapper
# --------------------------------------------------------------------------- #
def decoder_block(x_nchw, skip_nchw, params, *, residual=True, tile_h=None,
                  force_lane_pad=False, out_dtype=jnp.float32):
    x = jnp.transpose(x_nchw, (0, 2, 3, 1))                  # NHWC
    N, H, W, Cin = x.shape
    Hout, Wout = 4 * H, 4 * W
    dim, Cout = params['w1'].shape

    if residual:
        skip = jnp.transpose(skip_nchw, (0, 2, 3, 1))
        Hs, Ws, Sd = skip.shape[1], skip.shape[2], skip.shape[3]
        # TODO(synk): non-integer nearest-resize factors would need a gather path.
        assert Hout % Hs == 0 and Wout % Ws == 0
        rep_h, rep_w = Hout // Hs, Wout // Ws
    else:
        skip = None
        Hs = Ws = Sd = 1
        rep_h, rep_w = 1, 1

    # lane-dense output channels: pad to a multiple of 128 unless that would
    # more than double the HBM writeback (very small Cout).
    cout_pad = _round_up(Cout, 128)
    if not force_lane_pad and cout_pad > 2 * Cout:
        cout_pad = Cout

    single_buf = _single_buffer_supported()
    const_bufs = 1 if single_buf else 2
    budget = _vmem_budget_bytes()

    def _fits(th):
        hs_t_ = th // rep_h
        a = (H * W * Cin * 2 * 2                              # x row-slab (bf16)
             + 3 * W * Cin * Wout * dim * 2 * const_bufs      # fused interp+conv weight
             + (th + 2) * H * 2 * 2                           # row-interp window
             + th * Wout * dim * 2 * 2                        # mid tile (out)
             + (th + 2) * W * Cin * 4 + th * Wout * dim * 4)  # f32 intermediates
        b = (th * Wout * dim * 2 * 2                          # mid tile (in)
             + th * Wout * cout_pad * 2 * 2                   # out tile
             + (dim + Sd + 2) * cout_pad * 4 * const_bufs     # weights / biases
             + th * Wout * (dim + 2 * cout_pad) * 4)          # f32 intermediates
        if residual:
            b += hs_t_ * Ws * Sd * 2 * 2 + th * Wout * cout_pad * 4
        return max(a, b) <= int(0.9 * budget)

    TH = tile_h if tile_h is not None else _pick_tile_h(
        Hout, rep_h, Ws if residual else None, _fits)
    assert Hout % TH == 0 and TH % rep_h == 0
    n_ht = Hout // TH
    hs_t = TH // rep_h
    assert n_ht == 1 or (TH % 8 == 0 and (not residual or (hs_t * Ws) % 8 == 0))

    hi = lax.Precision.HIGHEST

    # zero-padded (one row/col each side) bilinear interpolation matrices so the
    # 3x3 conv reads zeros outside the upsampled image.
    Ahp = np.pad(_bilinear_matrix(H, Hout), ((1, 1), (0, 0)))       # (Hout+2, H)
    Awp = np.pad(_bilinear_matrix(W, Wout), ((1, 1), (0, 0)))       # (Wout+2, W)

    # per-tile overlapping row-interp windows: (n_ht, TH+2, H)
    ahp_win = np.stack([Ahp[t * TH: t * TH + TH + 2] for t in range(n_ht)])
    ahp_win = jnp.asarray(ahp_win, jnp.bfloat16)

    # width-interp fused with the 3x3-conv weights AND BN1's scale, pre-summed
    # over the width tap dw; one K-block per height tap dh:
    #   M[dh, w*Cin+c, j*dim+o] = sum_dw Awp[j+dw, w] * w3[dh,dw,c,o] * scale1[o]
    w3s = params['w3_hwio'].astype(jnp.float32) * params['scale1'][None, None, None, :]
    m_blocks = []
    for dh in range(3):
        acc = 0.0
        for dw in range(3):
            aw = jnp.asarray(Awp[dw:dw + Wout, :], jnp.float32)     # (Wout, W)
            acc = acc + jnp.einsum('jw,co->wcjo', aw, w3s[dh, dw], precision=hi)
        m_blocks.append(acc.reshape(W * Cin, Wout * dim))
    M = jnp.stack(m_blocks, axis=0).astype(jnp.bfloat16)            # (3, W*Cin, Wout*dim)
    # TODO(synk): for very large W this fused weight is O(W^2); it should then be
    # column-tiled over a third "parallel" grid axis instead of held whole in VMEM.

    x2d = x.astype(jnp.bfloat16).reshape(N, H, W * Cin)

    # BN folding: BN2 scale -> 1x1 weight; BN2 shift (+ up-conv bias, constant per
    # channel after nearest replication) -> single output bias; BN1 shift stays.
    b1 = params['shift1'][None, :].astype(jnp.float32)
    w1eff = _pad_lanes(params['w1'] * params['scale2'][None, :],
                       cout_pad).astype(jnp.bfloat16)
    bias_out = params['shift2'] + (params['bup'] if residual else 0.0)
    bias_out = _pad_lanes(bias_out[None, :], cout_pad).astype(jnp.float32)

    cparams = pltpu.CompilerParams(
        dimension_semantics=("parallel", "parallel"),
        vmem_limit_bytes=budget)

    # ---- kernel A: upsample + 3x3 conv -> bf16 (N, Hout, Wout*dim) --------- #
    mid = pl.pallas_call(
        functools.partial(_upsample_conv_kernel, tile_h=TH),
        out_shape=jax.ShapeDtypeStruct((N, Hout, Wout * dim), jnp.bfloat16),
        grid_spec=pltpu.PrefetchScalarGridSpec(
            num_scalar_prefetch=0,
            grid=(N, n_ht),
            in_specs=[
                pl.BlockSpec((1, H, W * Cin), lambda n, t: (n, 0, 0)),
                pl.BlockSpec((1, TH + 2, H), lambda n, t: (t, 0, 0)),
                _const_spec((3, W * Cin, Wout * dim), lambda n, t: (0, 0, 0),
                            single_buf),
            ],
            out_specs=pl.BlockSpec((1, TH, Wout * dim), lambda n, t: (n, t, 0)),
        ),
        compiler_params=cparams,
    )(x2d, ahp_win, M)

    # row-major compatible view change (done by XLA, effectively free)
    mid_px = mid.reshape(N, Hout * Wout, dim)

    # ---- kernel B: pointwise stages + residual in (pixels, channels) ------- #
    in_specs = [
        pl.BlockSpec((1, TH * Wout, dim), lambda n, t: (n, t, 0)),
        _const_spec((1, dim), lambda n, t: (0, 0), single_buf),
        _const_spec((dim, cout_pad), lambda n, t: (0, 0), single_buf),
        _const_spec((1, cout_pad), lambda n, t: (0, 0), single_buf),
    ]
    operands = [mid_px, b1, w1eff, bias_out]
    if residual:
        skip_px = skip.astype(jnp.bfloat16).reshape(N, Hs * Ws, Sd)
        wup = _pad_lanes(params['wup'], cout_pad).astype(jnp.bfloat16)
        in_specs += [
            pl.BlockSpec((1, hs_t * Ws, Sd), lambda n, t: (n, t, 0)),
            _const_spec((Sd, cout_pad), lambda n, t: (0, 0), single_buf),
        ]
        operands += [skip_px, wup]

    out_px = pl.pallas_call(
        functools.partial(_pointwise_residual_kernel,
                          rep_h=rep_h, rep_w=rep_w, ws=Ws, residual=residual),
        out_shape=jax.ShapeDtypeStruct((N, Hout * Wout, cout_pad), jnp.bfloat16),
        grid_spec=pltpu.PrefetchScalarGridSpec(
            num_scalar_prefetch=0,
            grid=(N, n_ht),
            in_specs=in_specs,
            out_specs=pl.BlockSpec((1, TH * Wout, cout_pad), lambda n, t: (n, t, 0)),
        ),
        compiler_params=cparams,
    )(*operands)

    out = out_px[..., :Cout] if cout_pad != Cout else out_px
    out = out.reshape(N, Hout, Wout, Cout).astype(out_dtype)
    return jnp.transpose(out, (0, 3, 1, 2))                         # NCHW


# --------------------------------------------------------------------------- #
# deterministic parameter init (synthetic; BN folded with running stats)
# --------------------------------------------------------------------------- #
def init_params(key, in_channels, out_channels, skip_dim, factor):
    dim = out_channels // factor
    eps = 1e-5
    k = jax.random.split(key, 12)
    w3_oihw = 0.2 * jax.random.normal(k[0], (dim, in_channels, 3, 3), jnp.float32)
    w1_oihw = 0.2 * jax.random.normal(k[1], (out_channels, dim, 1, 1), jnp.float32)
    wup_oihw = 0.2 * jax.random.normal(k[2], (out_channels, skip_dim, 1, 1), jnp.float32)
    bup = 0.1 * jax.random.normal(k[3], (out_channels,), jnp.float32)
    g1 = 1.0 + 0.1 * jax.random.normal(k[4], (dim,), jnp.float32)
    be1 = 0.1 * jax.random.normal(k[5], (dim,), jnp.float32)
    rm1 = 0.1 * jax.random.normal(k[6], (dim,), jnp.float32)
    rv1 = 1.0 + 0.1 * jnp.abs(jax.random.normal(k[7], (dim,), jnp.float32))
    g2 = 1.0 + 0.1 * jax.random.normal(k[8], (out_channels,), jnp.float32)
    be2 = 0.1 * jax.random.normal(k[9], (out_channels,), jnp.float32)
    rm2 = 0.1 * jax.random.normal(k[10], (out_channels,), jnp.float32)
    rv2 = 1.0 + 0.1 * jnp.abs(jax.random.normal(k[11], (out_channels,), jnp.float32))
    # TODO(synk): BatchNorm is applied with running stats (eval semantics), not batch stats.
    s1 = g1 / jnp.sqrt(rv1 + eps)
    s2 = g2 / jnp.sqrt(rv2 + eps)
    return {
        'w3_hwio': jnp.transpose(w3_oihw, (2, 3, 1, 0)),   # (3,3,Cin,dim)
        'w1': w1_oihw[:, :, 0, 0].T,                       # (dim, Cout)
        'wup': wup_oihw[:, :, 0, 0].T,                     # (Sd, Cout)
        'bup': bup,
        'scale1': s1, 'shift1': be1 - rm1 * s1,
        'scale2': s2, 'shift2': be2 - rm2 * s2,
    }


# --------------------------------------------------------------------------- #
# pure-JAX reference (independent formulation: explicit conv + gather, f32)
# --------------------------------------------------------------------------- #
def reference_forward(x_nchw, skip_nchw, params, *, residual=True):
    x = jnp.transpose(x_nchw, (0, 2, 3, 1)).astype(jnp.float32)
    skip = jnp.transpose(skip_nchw, (0, 2, 3, 1)).astype(jnp.float32)
    N, H, W, Cin = x.shape
    Hout, Wout = 4 * H, 4 * W
    hi = lax.Precision.HIGHEST
    Ah = jnp.asarray(_bilinear_matrix(H, Hout))
    Aw = jnp.asarray(_bilinear_matrix(W, Wout))
    u = jnp.einsum('ph,nhwc->npwc', Ah, x, precision=hi)
    u = jnp.einsum('qw,npwc->npqc', Aw, u, precision=hi)
    y = lax.conv_general_dilated(u, params['w3_hwio'], (1, 1), ((1, 1), (1, 1)),
                                 dimension_numbers=('NHWC', 'HWIO', 'NHWC'),
                                 precision=hi)
    y = jnp.maximum(y * params['scale1'] + params['shift1'], 0.0)
    z = jnp.einsum('nhwc,co->nhwo', y, params['w1'], precision=hi)
    z = z * params['scale2'] + params['shift2']
    if residual:
        up = jnp.einsum('nhwc,co->nhwo', skip, params['wup'], precision=hi) + params['bup']
        up = up[:, _nearest_indices(skip.shape[1], Hout)][:, :, _nearest_indices(skip.shape[2], Wout)]
        z = z + up
    return jnp.transpose(jnp.maximum(z, 0.0), (0, 3, 1, 2))


# --------------------------------------------------------------------------- #
if __name__ == "__main__":
    in_channels, out_channels, skip_dim, factor = 4, 8, 6, 2
    N, H, W = 2, 4, 4          # x spatial 4x4 -> upsampled 16x16
    Hs, Ws = 8, 8              # skip spatial (nearest-resized 2x in-kernel)

    key = jax.random.PRNGKey(0)
    kx, ks, kp = jax.random.split(key, 3)
    x = jax.random.normal(kx, (N, in_channels, H, W), jnp.float32)        # NCHW
    skip = jax.random.normal(ks, (N, skip_dim, Hs, Ws), jnp.float32)      # NCHW
    params = init_params(kp, in_channels, out_channels, skip_dim, factor)

    ref = reference_forward(x, skip, params, residual=True)

    # (1) compact-channel output + explicit row tiling (tile_h=8 -> grid (N, 2))
    out = decoder_block(x, skip, params, residual=True, tile_h=8)
    jax.block_until_ready(out)
    np.testing.assert_allclose(np.asarray(out), np.asarray(ref), rtol=5e-2, atol=5e-2)
    assert out.shape == (N, out_channels, 4 * H, 4 * W)

    # (2) lane-dense (128-padded) output path, auto tile size
    out_p = decoder_block(x, skip, params, residual=True, force_lane_pad=True)
    jax.block_until_ready(out_p)
    np.testing.assert_allclose(np.asarray(out_p), np.asarray(ref), rtol=5e-2, atol=5e-2)

    # (3) no-residual branch
    ref_nr = reference_forward(x, skip, params, residual=False)
    out_nr = decoder_block(x, skip, params, residual=False)
    jax.block_until_ready(out_nr)
    np.testing.assert_allclose(np.asarray(out_nr), np.asarray(ref_nr), rtol=5e-2, atol=5e-2)

    print("KERNEL_OK")
</pallas_src>

<mosaic_0001>
module attributes {stable_mosaic.version = 11 : i64} {
  func.func @_probe_kernel(%arg0: i32, %arg1: memref<8x128xf32, #tpu.memory_space<vmem>>, %arg2: memref<8x128xf32, #tpu.memory_space<vmem>>) attributes {dimension_semantics = [#tpu.dimension_semantics<arbitrary>], iteration_bounds = array<i64: 2>, scalar_prefetch = 0 : i64, scratch_operands = 0 : i64, tpu.core_type = #tpu.core_type<tc>, window_params = [{pipeline_mode = #tpu.pipeline_mode<synchronous>, transform_indices = @transform_0, window_bounds = array<i64: 8, 128>}, {pipeline_mode = #tpu.pipeline_mode<synchronous>, transform_indices = @transform_1, window_bounds = array<i64: 8, 128>}]} {
    %c0 = arith.constant 0 : index
    %c0_0 = arith.constant 0 : index
    %0 = vector.load %arg1[%c0, %c0_0] : memref<8x128xf32, #tpu.memory_space<vmem>>, vector<8x128xf32>
    %cst = arith.constant 1.000000e+00 : f32
    %1 = vector.broadcast %cst : f32 to vector<8x128xf32>
    %2 = arith.addf %0, %1 : vector<8x128xf32>
    %c0_1 = arith.constant 0 : index
    %c0_2 = arith.constant 0 : index
    %3 = vector.load %arg2[%c0_1, %c0_2] : memref<8x128xf32, #tpu.memory_space<vmem>>, vector<8x128xf32>
    tpu.vector_store %arg2[%c0_1, %c0_2], %2 {strides = array<i32>} : memref<8x128xf32, #tpu.memory_space<vmem>>, vector<8x128xf32>,
    return
  }
  func.func @transform_0(%arg0: i32) -> (i32, i32) {
    %c0_i32 = arith.constant 0 : i32
    %c0_i32_0 = arith.constant 0 : i32
    %c0_i32_1 = arith.constant 0 : i32
    return %c0_i32, %c0_i32_0 : i32, i32
  }
  func.func @transform_1(%arg0: i32) -> (i32, i32) {
    %c0_i32 = arith.constant 0 : i32
    %c0_i32_0 = arith.constant 0 : i32
    %c0_i32_1 = arith.constant 0 : i32
    return %c0_i32, %c0_i32_0 : i32, i32
  }
}

module attributes {stable_mosaic.version = 11 : i64} {
  func.func @_upsample_conv_kernel(%arg0: i32, %arg1: i32, %arg2: memref<1x4x16xbf16, #tpu.memory_space<vmem>>, %arg3: memref<1x10x4xbf16, #tpu.memory_space<vmem>>, %arg4: memref<3x16x64xbf16, #tpu.memory_space<vmem>>, %arg5: memref<1x8x64xbf16, #tpu.memory_space<vmem>>) attributes {dimension_semantics = [#tpu.dimension_semantics<parallel>, #tpu.dimension_semantics<parallel>], iteration_bounds = array<i64: 2, 2>, scalar_prefetch = 0 : i64, scratch_operands = 0 : i64, tpu.core_type = #tpu.core_type<tc>, window_params = [{transform_indices = @transform_0, window_bounds = array<i64: 1, 4, 16>}, {transform_indices = @transform_1, window_bounds = array<i64: 1, 10, 4>}, {pipeline_mode = #tpu.pipeline_mode<synchronous>, transform_indices = @transform_2, window_bounds = array<i64: 3, 16, 64>}, {transform_indices = @transform_3, window_bounds = array<i64: 1, 8, 64>}]} {
    %c0 = arith.constant 0 : index
    %c0_0 = arith.constant 0 : index
    %c0_1 = arith.constant 0 : index
    %0 = vector.load %arg2[%c0, %c0_0, %c0_1] : memref<1x4x16xbf16, #tpu.memory_space<vmem>>, vector<1x4x16xbf16>
    %1 = vector.shape_cast %0 : vector<1x4x16xbf16> to vector<4x16xbf16>
    %c0_2 = arith.constant 0 : index
    %c0_3 = arith.constant 0 : index
    %c0_4 = arith.constant 0 : index
    %2 = vector.load %arg3[%c0_2, %c0_3, %c0_4] : memref<1x10x4xbf16, #tpu.memory_space<vmem>>, vector<1x10x4xbf16>
    %3 = vector.shape_cast %2 : vector<1x10x4xbf16> to vector<10x4xbf16>
    %cst = arith.constant dense<0.000000e+00> : vector<10x16xf32>
    %4 = tpu.matmul %3, %1, %cst {dimension_numbers = #tpu.dot_dimension_numbers<[1], [0], [0], [1], [0, 0, 1, 1], [], []>} : vector<10x4xbf16>, vector<4x16xbf16>, vector<10x16xf32> -> vector<10x16xf32>
    %5 = arith.truncf %4 : vector<10x16xf32> to vector<10x16xbf16>
    %6 = vector.extract_strided_slice %5 {offsets = [0, 0], sizes = [8, 16], strides = [1, 1]} : vector<10x16xbf16> to vector<8x16xbf16>
    %c0_5 = arith.constant 0 : index
    %c0_6 = arith.constant 0 : index
    %c0_7 = arith.constant 0 : index
    %7 = vector.load %arg4[%c0_5, %c0_6, %c0_7] : memref<3x16x64xbf16, #tpu.memory_space<vmem>>, vector<1x16x64xbf16>
    %8 = vector.shape_cast %7 : vector<1x16x64xbf16> to vector<16x64xbf16>
    %cst_8 = arith.constant dense<0.000000e+00> : vector<8x64xf32>
    %9 = tpu.matmul %6, %8, %cst_8 {dimension_numbers = #tpu.dot_dimension_numbers<[1], [0], [0], [1], [0, 0, 1, 1], [], []>} : vector<8x16xbf16>, vector<16x64xbf16>, vector<8x64xf32> -> vector<8x64xf32>
    %10 = vector.extract_strided_slice %5 {offsets = [1, 0], sizes = [8, 16], strides = [1, 1]} : vector<10x16xbf16> to vector<8x16xbf16>
    %c1 = arith.constant 1 : index
    %c0_9 = arith.constant 0 : index
    %c0_10 = arith.constant 0 : index
    %11 = vector.load %arg4[%c1, %c0_9, %c0_10] : memref<3x16x64xbf16, #tpu.memory_space<vmem>>, vector<1x16x64xbf16>
    %12 = vector.shape_cast %11 : vector<1x16x64xbf16> to vector<16x64xbf16>
    %cst_11 = arith.constant dense<0.000000e+00> : vector<8x64xf32>
    %13 = tpu.matmul %10, %12, %cst_11 {dimension_numbers = #tpu.dot_dimension_numbers<[1], [0], [0], [1], [0, 0, 1, 1], [], []>} : vector<8x16xbf16>, vector<16x64xbf16>, vector<8x64xf32> -> vector<8x64xf32>
    %14 = arith.addf %9, %13 : vector<8x64xf32>
    %15 = vector.extract_strided_slice %5 {offsets = [2, 0], sizes = [8, 16], strides = [1, 1]} : vector<10x16xbf16> to vector<8x16xbf16>
    %c2 = arith.constant 2 : index
    %c0_12 = arith.constant 0 : index
    %c0_13 = arith.constant 0 : index
    %16 = vector.load %arg4[%c2, %c0_12, %c0_13] : memref<3x16x64xbf16, #tpu.memory_space<vmem>>, vector<1x16x64xbf16>
    %17 = vector.shape_cast %16 : vector<1x16x64xbf16> to vector<16x64xbf16>
    %cst_14 = arith.constant dense<0.000000e+00> : vector<8x64xf32>
    %18 = tpu.matmul %15, %17, %cst_14 {dimension_numbers = #tpu.dot_dimension_numbers<[1], [0], [0], [1], [0, 0, 1, 1], [], []>} : vector<8x16xbf16>, vector<16x64xbf16>, vector<8x64xf32> -> vector<8x64xf32>
    %19 = arith.addf %14, %18 : vector<8x64xf32>
    %20 = arith.truncf %19 : vector<8x64xf32> to vector<8x64xbf16>
    %c0_15 = arith.constant 0 : index
    %c0_16 = arith.constant 0 : index
    %c0_17 = arith.constant 0 : index
    %21 = vector.load %arg5[%c0_15, %c0_16, %c0_17] : memref<1x8x64xbf16, #tpu.memory_space<vmem>>, vector<1x8x64xbf16>
    %22 = vector.shape_cast %21 : vector<1x8x64xbf16> to vector<8x64xbf16>
    %23 = vector.shape_cast %20 : vector<8x64xbf16> to vector<1x8x64xbf16>
    tpu.vector_store %arg5[%c0_15, %c0_16, %c0_17], %23 {strides = array<i32>} : memref<1x8x64xbf16, #tpu.memory_space<vmem>>, vector<1x8x64xbf16>,
    return
  }
  func.func @transform_0(%arg0: i32, %arg1: i32) -> (i32, i32, i32) {
    %c0_i32 = arith.constant 0 : i32
    %c0_i32_0 = arith.constant 0 : i32
    %c0_i32_1 = arith.constant 0 : i32
    return %arg0, %c0_i32, %c0_i32_0 : i32, i32, i32
  }
  func.func @transform_1(%arg0: i32, %arg1: i32) -> (i32, i32, i32) {
    %c0_i32 = arith.constant 0 : i32
    %c0_i32_0 = arith.constant 0 : i32
    %c0_i32_1 = arith.constant 0 : i32
    return %arg1, %c0_i32, %c0_i32_0 : i32, i32, i32
  }
  func.func @transform_2(%arg0: i32, %arg1: i32) -> (i32, i32, i32) {
    %c0_i32 = arith.constant 0 : i32
    %c0_i32_0 = arith.constant 0 : i32
    %c0_i32_1 = arith.constant 0 : i32
    %c0_i32_2 = arith.constant 0 : i32
    return %c0_i32, %c0_i32_0, %c0_i32_1 : i32, i32, i32
  }
  func.func @transform_3(%arg0: i32, %arg1: i32) -> (i32, i32, i32) {
    %c0_i32 = arith.constant 0 : i32
    %c0_i32_0 = arith.constant 0 : i32
    return %arg0, %arg1, %c0_i32 : i32, i32, i32
  }
}

</mosaic_0001>

<llo_original>
// kernel: tpu_custom_call.1
$region0: #{tpu_custom_call.1}
  #allocation0 [shape = 'u32[]', space=smem, size = 0x4, offset = 0x4, fixed_abs, tag = 'smem constant byte address 0x4 - core index']
  #allocation1 [shape = 'u32[72,128]{1,0:T(1,128)}', space=vmem, size = 0x9000, scoped, tag = 'internal scratch']
  %s0 = inlined_call_operand.hbm [shape: f32[8,128], index: 0, kind: input, shape index: {}]
  %s1 = inlined_call_operand.hbm [shape: f32[8,128], index: 1, kind: output, shape index: {}]
  %s2 = sld [smem:[#allocation0]]
  $region41: #{tpu_custom_call.1} parent=0
    _
  %s4 = ssub.s32 1, %s2
  %s5 = scalar_select 0, %s4, %s2
  $region1: #{tpu_custom_call.1} parent=0
    #allocation2 [shape = 'u8[4096]{0}', space=vmem, size = 0x1000, scoped, tag = 'input window, operand 0, single buffered']
    #allocation3 [shape = 's32[2]{0}', space=sflag, size = 0x8, scoped, tag = 'scoped memory for tpu_custom_call.1']
    #allocation4 [shape = 's32[2]{0}', space=sflag, size = 0x8, scoped, tag = 'scoped memory for tpu_custom_call.1']
    #allocation5 [shape = 'u8[4096]{0}', space=vmem, size = 0x1000, scoped, tag = 'output window, operand 0, single buffered']
    %6 = vsyncpa [#allocation3], 0
    %7 = vsyncpa [#allocation4], 0
    loop: start=0, step=1, limit=4
    $region2: #{tpu_custom_call.1} parent=1 // loop_pre_header
      _
    $region3: #{tpu_custom_call.1} parent=1 // loop_header
      %s9 = sphi 0, %s13
      %p10 = scmp.ge.s32.totalorder %s9, 4
      %s17 = sphi 0, %s17
      %s19 = sphi 0, %s17
      %s20 = sphi 0, %s19
      %s34 = sphi 0, %s20
      %s38 = sphi 0, %s38
      %s40 = sphi 0, %s38
      %s41 = sphi 0, %s40
      %s55 = sphi 0, %s41
    $region4: #{tpu_custom_call.1} parent=1 // loop_header_branch
      %12 = sbr.rel (%p10) target = $region8
    $region5: #{tpu_custom_call.1} parent=1 // loop_body
      %s14 = ssub.s32 %s9, 1
      %s15 = ssub.s32 %s9, 2
      %s16 = sadd.s32 %s9, 1
      %s18 = sadd.s32 %s17, 1
      %p21 = scmp.eq.s32.totalorder %s9, 1
      %p22 = scmp.ne.s32.totalorder %s17, %s19
      %p23 = scmp.eq.s32.totalorder %s9, 0
      %p24 = por %p22, %p23
      %p25 = scmp.ne.s32.totalorder %s17, %s19
      %p26 = scmp.eq.s32.totalorder %s14, 1
      %p27 = por %p25, %p26
      %p28 = scmp.ne.s32.totalorder %s19, %s20
      %p29 = scmp.eq.s32.totalorder %s14, 0
      %p30 = por %p28, %p29
      %p31 = scmp.ne.s32.totalorder %s19, %s20
      %p32 = scmp.eq.s32.totalorder %s15, 1
      %p33 = por %p31, %p32
      %p35 = scmp.ne.s32.totalorder %s20, %s34
      %p36 = scmp.eq.s32.totalorder %s15, 0
      %p37 = por %p35, %p36
      %s39 = sadd.s32 %s38, 1
      %p42 = scmp.eq.s32.totalorder %s9, 1
      %p43 = scmp.ne.s32.totalorder %s38, %s40
      %p44 = scmp.eq.s32.totalorder %s9, 0
      %p45 = por %p43, %p44
      %p46 = scmp.ne.s32.totalorder %s38, %s40
      %p47 = scmp.eq.s32.totalorder %s14, 1
      %p48 = por %p46, %p47
      %p49 = scmp.ne.s32.totalorder %s40, %s41
      %p50 = scmp.eq.s32.totalorder %s14, 0
      %p51 = por %p49, %p50
      %p52 = scmp.ne.s32.totalorder %s40, %s41
      %p53 = scmp.eq.s32.totalorder %s15, 1
      %p54 = por %p52, %p53
      %p56 = scmp.ne.s32.totalorder %s41, %s55
      %p57 = scmp.eq.s32.totalorder %s15, 0
      %p58 = por %p56, %p57
      %p59 = scmp.le.s32.totalorder 1, %s9
      %p60 = scmp.lt.s32.totalorder %s9, 3
      %p61 = pnand %p59, %p60
      %p62 = pneg %p61
      // Predicated region
      $region9: #{tpu_custom_call.1} parent=5 // pred_check
        _
      $region10: #{tpu_custom_call.1} parent=5 // pred_check_branch
        %64 = sbr.rel (%p61) target = $region12
      $region11: #{tpu_custom_call.1} parent=5 // pred_region
        %s65 = ssub.s32 %s9, 1
        // Predicated region
        $region13: #{tpu_custom_call.1} parent=11 // pred_check
          %p66 = pneg %p30
        $region14: #{tpu_custom_call.1} parent=11 // pred_check_branch
          %68 = sbr.rel (%p66) target = $region16
        $region15: #{tpu_custom_call.1} parent=11 // pred_region
          %70 = vsyncadd [#allocation3], 0
          %s72 = sshll.u32 %s0, 4
          %s73 = int_to_ptr.hbm [resolvable:$true] %s72
          %s74 = sshll.u32 [#allocation2], 4
          %s75 = int_to_ptr.vmem [resolvable:$true] %s74
          %77 = dma.hbm_to_vmem [thread:$0]  %s73, 128, %s75, [#allocation3]
        $region16: #{tpu_custom_call.1} parent=11 // pred_fallthru
          _
      $region12: #{tpu_custom_call.1} parent=5 // pred_fallthru
        _
      %p78 = scmp.lt.s32.totalorder %s9, 2
      // Predicated region
      $region17: #{tpu_custom_call.1} parent=5 // pred_check
        %p79 = pneg %p78
      $region18: #{tpu_custom_call.1} parent=5 // pred_check_branch
        %81 = sbr.rel (%p79) target = $region20
      $region19: #{tpu_custom_call.1} parent=5 // pred_region
        _
      $region20: #{tpu_custom_call.1} parent=5 // pred_fallthru
        _
      %p82 = scmp.le.s32.totalorder 1, %s9
      %p83 = scmp.lt.s32.totalorder %s9, 3
      %p84 = pnand %p82, %p83
      %p85 = pneg %p84
      // Predicated region
      $region21: #{tpu_custom_call.1} parent=5 // pred_check
        _
      $region22: #{tpu_custom_call.1} parent=5 // pred_check_branch
        %87 = sbr.rel (%p84) target = $region24
      $region23: #{tpu_custom_call.1} parent=5 // pred_region
        %s88 = ssub.s32 %s9, 1
        // Predicated region
        $region25: #{tpu_custom_call.1} parent=23 // pred_check
          %p89 = pneg %p30
        $region26: #{tpu_custom_call.1} parent=23 // pred_check_branch
          %91 = sbr.rel (%p89) target = $region28
        $region27: #{tpu_custom_call.1} parent=23 // pred_region
          %93 = dma.done [#allocation3], 128
        $region28: #{tpu_custom_call.1} parent=23 // pred_fallthru
          _
        %p94 = pneg %p30
        %p95 = pneg %p27
        %p96 = pneg %p51
        %p97 = pneg %p48
        %v98 = vld [vmem:[#allocation2] sm:$0xff]
        %v99 = vadd.f32 %v98, 1.0
        %100 = vst [vmem:[#allocation5] sm:$0xff] %v99
        // Predicated region
        $region29: #{tpu_custom_call.1} parent=23 // pred_check
          %p101 = pneg %p48
        $region30: #{tpu_custom_call.1} parent=23 // pred_check_branch
          %103 = sbr.rel (%p101) target = $region32
        $region31: #{tpu_custom_call.1} parent=23 // pred_region
          %105 = vsyncadd [#allocation4], 0
          %s107 = sshll.u32 [#allocation5], 4
          %s108 = int_to_ptr.vmem [resolvable:$true] %s107
          %s109 = sshll.u32 %s1, 4
          %s110 = int_to_ptr.hbm [resolvable:$true] %s109
          %112 = dma.vmem_to_hbm [thread:$0]  %s108, 128, %s110, [#allocation4]
        $region32: #{tpu_custom_call.1} parent=23 // pred_fallthru
          _
        // Predicated region
        $region33: #{tpu_custom_call.1} parent=23 // pred_check
          %p113 = pneg %p48
        $region34: #{tpu_custom_call.1} parent=23 // pred_check_branch
          %115 = sbr.rel (%p113) target = $region36
        $region35: #{tpu_custom_call.1} parent=23 // pred_region
          %117 = dma.done [#allocation4], 128
        $region36: #{tpu_custom_call.1} parent=23 // pred_fallthru
          _
      $region24: #{tpu_custom_call.1} parent=5 // pred_fallthru
        _
      %p118 = scmp.le.s32.totalorder 2, %s9
      // Predicated region
      $region37: #{tpu_custom_call.1} parent=5 // pred_check
        %p119 = pneg %p118
      $region38: #{tpu_custom_call.1} parent=5 // pred_check_branch
        %121 = sbr.rel (%p119) target = $region40
      $region39: #{tpu_custom_call.1} parent=5 // pred_region
        %s122 = ssub.s32 %s9, 2
      $region40: #{tpu_custom_call.1} parent=5 // pred_fallthru
        _
    $region6: #{tpu_custom_call.1} parent=1 // loop_footer
      %s13 = sadd.s32 1, %s9
    $region7: #{tpu_custom_call.1} parent=1 // loop_footer_branch
      %8 = sbr.rel target = $region3
    $region8: #{tpu_custom_call.1} parent=1 // loop_exit
      _
    %123 = vsyncpa [#allocation3], 1
    %s124 = scalar_lea.sflag [#allocation3], 1
    %125 = vsyncpa %s124, 1
    %126 = vsyncpa [#allocation4], 1
    %s127 = scalar_lea.sflag [#allocation4], 1
    %128 = vsyncpa %s127, 1

// kernel: tpu_custom_call.1
$region0: #{tpu_custom_call.1}
  #allocation0 [shape = 'u32[]', space=smem, size = 0x4, offset = 0x4, fixed_abs, tag = 'smem constant byte address 0x4 - core index']
  #allocation1 [shape = 'u32[72,128]{1,0:T(1,128)}', space=vmem, size = 0x9000, scoped, tag = 'internal scratch']
  %s0 = inlined_call_operand.vmem [shape: bf16[2,4,16], index: 0, kind: input, shape index: {}]
  %s1 = inlined_call_operand.vmem [shape: bf16[2,10,4], index: 1, kind: input, shape index: {}]
  %s2 = inlined_call_operand.hbm [shape: bf16[3,16,64], index: 2, kind: input, shape index: {}]
  %s3 = inlined_call_operand.hbm [shape: bf16[2,16,64], index: 3, kind: output, shape index: {}]
  %s4 = sld [smem:[#allocation0]]
  $region49: #{tpu_custom_call.1} parent=0
    _
  %s6 = ssub.s32 1, %s4
  %s7 = scalar_select 0, %s6, %s4
  $region1: #{tpu_custom_call.1} parent=0
    #allocation2 [shape = 'u8[12288]{0}', space=vmem, size = 0x3000, scoped, tag = 'input window, operand 2, single buffered']
    #allocation3 [shape = 's32[2]{0}', space=sflag, size = 0x8, scoped, tag = 'scoped memory for tpu_custom_call.1']
    #allocation4 [shape = 's32[2]{0}', space=sflag, size = 0x8, scoped, tag = 'scoped memory for tpu_custom_call.1']
    #allocation5 [shape = 'u8[4096]{0}', space=vmem, size = 0x1000, scoped, tag = 'output window, operand 0']
    %8 = vsyncpa [#allocation3], 0
    %9 = vsyncpa [#allocation4], 0
    %s10 = scalar_lea.sflag [#allocation4], 1
    %11 = vsyncpa %s10, 0
    loop: start=0, step=1, limit=6
    $region2: #{tpu_custom_call.1} parent=1 // loop_pre_header
      _
    $region3: #{tpu_custom_call.1} parent=1 // loop_header
      %s13 = sphi 0, %s17
      %p14 = scmp.ge.s32.totalorder %s13, 6
      %s20 = sphi 0, %s32
      %s21 = sphi 0, %s28
      %s22 = sphi 0, %s20
      %s23 = sphi 0, %s21
      %s24 = sphi 0, %s22
      %s25 = sphi 0, %s23
      %s35 = sphi 0, %s37
      %s38 = sphi 0, %s35
      %s39 = sphi 0, %s38
      %s55 = sphi 0, %s39
      %s61 = sphi 0, %s63
      %s64 = sphi 0, %s61
      %s65 = sphi 0, %s64
      %s81 = sphi 0, %s65
      %s85 = sphi 0, %s85
      %s87 = sphi 0, %s85
      %s88 = sphi 0, %s87
      %s102 = sphi 0, %s88
      %s110 = sphi 0, %s112
      %s113 = sphi 0, %s110
      %s114 = sphi 0, %s113
      %s130 = sphi 0, %s114
    $region4: #{tpu_custom_call.1} parent=1 // loop_header_branch
      %16 = sbr.rel (%p14) target = $region8
    $region5: #{tpu_custom_call.1} parent=1 // loop_body
      %s18 = ssub.s32 %s13, 1
      %s19 = ssub.s32 %s13, 2
      %s26 = sadd.s32 1, %s21
      %p27 = scmp.ge.s32.totalorder %s26, 2
      %s28 = scalar_select %p27, 0, %s26
      %s29 = sadd.s32 1, %s20
      %s30 = scalar_select %p27, %s29, %s20
      %p31 = scmp.ge.s32.totalorder %s30, 2
      %s32 = scalar_select %p31, 0, %s30
      %s33 = ssub.s32 %s20, %s32
      %p34 = scmp.eq.s32.totalorder %s33, 0
      %s36 = sadd.s32 %s35, 1
      %s37 = scalar_select %p34, %s35, %s36
      %p40 = pneg %p34
      %p41 = scmp.eq.s32.totalorder %s13, 3
      %p42 = por %p40, %p41
      %p43 = scmp.ne.s32.totalorder %s35, %s38
      %p44 = scmp.eq.s32.totalorder %s13, 0
      %p45 = por %p43, %p44
      %p46 = scmp.ne.s32.totalorder %s35, %s38
      %p47 = scmp.eq.s32.totalorder %s18, 3
      %p48 = por %p46, %p47
      %p49 = scmp.ne.s32.totalorder %s38, %s39
      %p50 = scmp.eq.s32.totalorder %s18, 0
      %p51 = por %p49, %p50
      %p52 = scmp.ne.s32.totalorder %s38, %s39
      %p53 = scmp.eq.s32.totalorder %s19, 3
      %p54 = por %p52, %p53
      %p56 = scmp.ne.s32.totalorder %s39, %s55
      %p57 = scmp.eq.s32.totalorder %s19, 0
      %p58 = por %p56, %p57
      %s59 = ssub.s32 %s21, %s28
      %p60 = scmp.eq.s32.totalorder %s59, 0
      %s62 = sadd.s32 %s61, 1
      %s63 = scalar_select %p60, %s61, %s62
      %p66 = pneg %p60
      %p67 = scmp.eq.s32.totalorder %s13, 3
      %p68 = por %p66, %p67
      %p69 = scmp.ne.s32.totalorder %s61, %s64
      %p70 = scmp.eq.s32.totalorder %s13, 0
      %p71 = por %p69, %p70
      %p72 = scmp.ne.s32.totalorder %s61, %s64
      %p73 = scmp.eq.s32.totalorder %s18, 3
      %p74 = por %p72, %p73
      %p75 = scmp.ne.s32.totalorder %s64, %s65
      %p76 = scmp.eq.s32.totalorder %s18, 0
      %p77 = por %p75, %p76
      %p78 = scmp.ne.s32.totalorder %s64, %s65
      %p79 = scmp.eq.s32.totalorder %s19, 3
      %p80 = por %p78, %p79
      %p82 = scmp.ne.s32.totalorder %s65, %s81
      %p83 = scmp.eq.s32.totalorder %s19, 0
      %p84 = por %p82, %p83
      %s86 = sadd.s32 %s85, 1
      %p89 = scmp.eq.s32.totalorder %s13, 3
      %p90 = scmp.ne.s32.totalorder %s85, %s87
      %p91 = scmp.eq.s32.totalorder %s13, 0
      %p92 = por %p90, %p91
      %p93 = scmp.ne.s32.totalorder %s85, %s87
      %p94 = scmp.eq.s32.totalorder %s18, 3
      %p95 = por %p93, %p94
      %p96 = scmp.ne.s32.totalorder %s87, %s88
      %p97 = scmp.eq.s32.totalorder %s18, 0
      %p98 = por %p96, %p97
      %p99 = scmp.ne.s32.totalorder %s87, %s88
      %p100 = scmp.eq.s32.totalorder %s19, 3
      %p101 = por %p99, %p100
      %p103 = scmp.ne.s32.totalorder %s88, %s102
      %p104 = scmp.eq.s32.totalorder %s19, 0
      %p105 = por %p103, %p104
      %s106 = ssub.s32 %s20, %s32
      %s107 = ssub.s32 %s21, %s28
      %s108 = sor.u32 %s106, %s107
      %p109 = scmp.eq.s32.totalorder %s108, 0
      %s111 = sadd.s32 %s110, 1
      %s112 = scalar_select %p109, %s110, %s111
      %p115 = pneg %p109
      %p116 = scmp.eq.s32.totalorder %s13, 3
      %p117 = por %p115, %p116
      %p118 = scmp.ne.s32.totalorder %s110, %s113
      %p119 = scmp.eq.s32.totalorder %s13, 0
      %p120 = por %p118, %p119
      %p121 = scmp.ne.s32.totalorder %s110, %s113
      %p122 = scmp.eq.s32.totalorder %s18, 3
      %p123 = por %p121, %p122
      %p124 = scmp.ne.s32.totalorder %s113, %s114
      %p125 = scmp.eq.s32.totalorder %s18, 0
      %p126 = por %p124, %p125
      %p127 = scmp.ne.s32.totalorder %s113, %s114
      %p128 = scmp.eq.s32.totalorder %s19, 3
      %p129 = por %p127, %p128
      %p131 = scmp.ne.s32.totalorder %s114, %s130
      %p132 = scmp.eq.s32.totalorder %s19, 0
      %p133 = por %p131, %p132
      %p134 = scmp.le.s32.totalorder 1, %s13
      %p135 = scmp.lt.s32.totalorder %s13, 5
      %p136 = pnand %p134, %p135
      %p137 = pneg %p136
      // Predicated region
      $region9: #{tpu_custom_call.1} parent=5 // pred_check
        _
      $region10: #{tpu_custom_call.1} parent=5 // pred_check_branch
        %139 = sbr.rel (%p136) target = $region12
      $region11: #{tpu_custom_call.1} parent=5 // pred_region
        %s140 = ssub.s32 %s13, 1
        // Predicated region
        $region13: #{tpu_custom_call.1} parent=11 // pred_check
          %p141 = pneg %p98
        $region14: #{tpu_custom_call.1} parent=11 // pred_check_branch
          %143 = sbr.rel (%p141) target = $region16
        $region15: #{tpu_custom_call.1} parent=11 // pred_region
          %145 = vsyncadd [#allocation3], 0
          %s146 = sshll.u32 %s2, 4
          %s147 = int_to_ptr.hbm [resolvable:$true] %s146
          %s148 = sshll.u32 [#allocation2], 4
          %s149 = int_to_ptr.vmem [resolvable:$true] %s148
          %154 = dma.hbm_to_vmem [thread:$0]  %s147, 384, %s149, [#allocation3], 64, 64, 4
        $region16: #{tpu_custom_call.1} parent=11 // pred_fallthru
          _
      $region12: #{tpu_custom_call.1} parent=5 // pred_fallthru
        _
      %p155 = scmp.lt.s32.totalorder %s13, 4
      // Predicated region
      $region17: #{tpu_custom_call.1} parent=5 // pred_check
        %p156 = pneg %p155
      $region18: #{tpu_custom_call.1} parent=5 // pred_check_branch
        %158 = sbr.rel (%p156) target = $region20
      $region19: #{tpu_custom_call.1} parent=5 // pred_region
        // Predicated region
        $region21: #{tpu_custom_call.1} parent=19 // pred_check
          %p159 = pneg %p45
        $region22: #{tpu_custom_call.1} parent=19 // pred_check_branch
          %161 = sbr.rel (%p159) target = $region24
        $region23: #{tpu_custom_call.1} parent=19 // pred_region
          %p162 = scmp.lt.s32.totalorder %s20, 1
          %s163 = scalar_select %p162, %s20, 1
          %s164 = smul.addr %s163, 2
          %s165 = scalar_lea.vmem %s0, %s164
        $region24: #{tpu_custom_call.1} parent=19 // pred_fallthru
          _
        // Predicated region
        $region25: #{tpu_custom_call.1} parent=19 // pred_check
          %p166 = pneg %p71
        $region26: #{tpu_custom_call.1} parent=19 // pred_check_branch
          %168 = sbr.rel (%p166) target = $region28
        $region27: #{tpu_custom_call.1} parent=19 // pred_region
          %p169 = scmp.lt.s32.totalorder %s21, 1
          %s170 = scalar_select %p169, %s21, 1
          %s171 = smul.addr %s170, 2
          %s172 = smul.addr %s171, 4
          %s173 = scalar_lea.vmem %s1, %s172
        $region28: #{tpu_custom_call.1} parent=19 // pred_fallthru
          _
      $region20: #{tpu_custom_call.1} parent=5 // pred_fallthru
        _
      %p174 = scmp.le.s32.totalorder 1, %s13
      %p175 = scmp.lt.s32.totalorder %s13, 5
      %p176 = pnand %p174, %p175
      %p177 = pneg %p176
      // Predicated region
      $region29: #{tpu_custom_call.1} parent=5 // pred_check
        _
      $region30: #{tpu_custom_call.1} parent=5 // pred_check_branch
        %179 = sbr.rel (%p176) target = $region32
      $region31: #{tpu_custom_call.1} parent=5 // pred_region
        %s180 = ssub.s32 %s13, 1
        // Predicated region
        $region33: #{tpu_custom_call.1} parent=31 // pred_check
          %p181 = pneg %p98
        $region34: #{tpu_custom_call.1} parent=31 // pred_check_branch
          %183 = sbr.rel (%p181) target = $region36
        $region35: #{tpu_custom_call.1} parent=31 // pred_region
          %185 = dma.done [#allocation3], 384
        $region36: #{tpu_custom_call.1} parent=31 // pred_fallthru
          _
        %p186 = scmp.lt.s32.totalorder %s22, 1
        %s187 = scalar_select %p186, %s22, 1
        %s188 = smul.addr %s187, 2
        %s189 = scalar_lea.vmem %s0, %s188
        %p190 = pneg %p51
        %p191 = pneg %p48
        %p192 = scmp.lt.s32.totalorder %s23, 1
        %s193 = scalar_select %p192, %s23, 1
        %s194 = smul.addr %s193, 2
        %s195 = smul.addr %s194, 4
        %s196 = scalar_lea.vmem %s1, %s195
        %p197 = pneg %p77
        %p198 = pneg %p74
        %p199 = pneg %p98
        %p200 = pneg %p95
        %p201 = pneg %p126
        %p202 = pneg %p123
        %s203 = sand.u32 %s113, 1
        %s204 = scalar_lea.sflag [#allocation4], %s203
        %s205 = sand.u32 %s113, 1
        %s206 = smul.addr %s205, 4
        %s207 = scalar_lea.vmem [#allocation5], %s206
        %p208 = scmp.lt.s32.totalorder %s22, 1
        %s209 = scalar_select %p208, %s22, 1
        %s210 = smul.addr %s209, 2
        %s211 = scalar_lea.vmem %s0, %s210
        %p212 = scmp.lt.s32.totalorder %s23, 1
        %s213 = scalar_select %p212, %s23, 1
        %s214 = smul.addr %s213, 2
        %s215 = smul.addr %s214, 4
        %s216 = scalar_lea.vmem %s1, %s215
        %v218 = vld [vmem:[%s211] sm:$0x3]
        %v219 = vld [vmem:[%s216] sm:$0xf]
        %v220 = vld [vmem:[%s216 + $0x4] sm:$0x1]
        %v223 = vunpack.c.l.b16 %v219
        %v224 = vunpack.c.l.b16 %v220
        %v225 = vpack.c.b16 %v224, %v223
        %vm226 = vcmask 31744
        %v228 = vsel %vm226, %v225, 0
        %vm230 = vcmask 1041408
        %v232 = vsel %vm230, %v218, 0
        %234 = vmatpush.bf16.msra.mxu0 0
        %235 = vmatpush.bf16.msra.mxu0 0
        %236 = vmatpush.bf16.msra.mxu0 0
        %237 = vmatpush.bf16.msra.mxu0 0
        %238 = vmatpush.bf16.msra.mxu0 0
        %239 = vmatpush.bf16.msra.mxu0 0
        %240 = vmatpush.bf16.msra.mxu0 0
        %241 = vmatpush.bf16.msra.mxu0 %v232
        %242 = vmatmul.bf16.gmra.mxu0 %v228
        %v243 = vpop.f32.mrf.mxu0
        %v244 = vadd.f32 0.0, %v243
        %v245 = vpop.f32.mrf.mxu0
        %v246 = vadd.f32 0.0, %v245
        %247 = vdwg.mxu0
        %v248 = vpack.c.bf16 %v244, %v244
        %v249 = vpack.c.bf16 %v246, %v246
        %v250 = vld [vmem:[#allocation2] sm:$0xf]
        %v251 = vld [vmem:[#allocation2 + $0x4] sm:$0xf]
        %s252 = scalar_lea.vmem [#allocation2], 8
        %v253 = vld [vmem:[%s252] sm:$0xf]
        %v254 = vld [vmem:[%s252 + $0x4] sm:$0xf]
        %v257 = vunpack.c.l.b16 %v248
        %v258 = vunpack.c.l.b16 %v249
        %v259 = vpack.c.b16 %v258, %v257
        %v261 = vshrl.u32 %v259, 16
        %v263 = vshll.u32 %v259, 16
        %v265 = vrot.slane %v263, 1
        %v266 = vor.u32 %v261, %v265
        %v269 = vunpack.c.l.b16 %v253
        %v270 = vunpack.c.l.b16 %v254
        %v271 = vpack.c.b16 %v270, %v269
        %vm273 = vcmask 130048
        %v275 = vsel %vm273, %v266, 0
        %277 = vmatpush.bf16.msra.mxu0 0
        %278 = vmatpush.bf16.msra.mxu0 0
        %279 = vmatpush.bf16.msra.mxu0 0
        %280 = vmatpush.bf16.msra.mxu0 0
        %281 = vmatpush.bf16.msra.mxu0 0
        %282 = vmatpush.bf16.msra.mxu0 0
        %283 = vmatpush.bf16.msra.mxu0 0
        %284 = vmatpush.bf16.msra.mxu0 %v271
        %285 = vmatmul.bf16.gmra.mxu0 %v275
        %v286 = vpop.f32.mrf.mxu0
        %v287 = vadd.f32 0.0, %v286
        %v288 = vpop.f32.mrf.mxu0
        %289 = vdwg.mxu0
        %v292 = vunpack.c.l.b16 %v250
        %v293 = vunpack.c.l.b16 %v251
        %v294 = vpack.c.b16 %v293, %v292
        %v297 = vsel %vm273, %v248, 0
        %299 = vmatpush.bf16.msra.mxu0 0
        %300 = vmatpush.bf16.msra.mxu0 0
        %301 = vmatpush.bf16.msra.mxu0 0
        %302 = vmatpush.bf16.msra.mxu0 0
        %303 = vmatpush.bf16.msra.mxu0 0
        %304 = vmatpush.bf16.msra.mxu0 0
        %305 = vmatpush.bf16.msra.mxu0 0
        %306 = vmatpush.bf16.msra.mxu0 %v294
        %307 = vmatmul.bf16.gmra.mxu0 %v297
        %v308 = vpop.f32.mrf.mxu0
        %v309 = vadd.f32 %v287, %v308
        %v310 = vpop.f32.mrf.mxu0
        %311 = vdwg.mxu0
        %s312 = scalar_lea.vmem [#allocation2], 16
        %v313 = vld [vmem:[%s312] sm:$0xf]
        %v314 = vld [vmem:[%s312 + $0x4] sm:$0xf]
        %v315 = vrot.slane %v259, 1
        %v318 = vunpack.c.l.b16 %v313
        %v319 = vunpack.c.l.b16 %v314
        %v320 = vpack.c.b16 %v319, %v318
        %v323 = vsel %vm273, %v315, 0
        %325 = vmatpush.bf16.msra.mxu0 0
        %326 = vmatpush.bf16.msra.mxu0 0
        %327 = vmatpush.bf16.msra.mxu0 0
        %328 = vmatpush.bf16.msra.mxu0 0
        %329 = vmatpush.bf16.msra.mxu0 0
        %330 = vmatpush.bf16.msra.mxu0 0
        %331 = vmatpush.bf16.msra.mxu0 0
        %332 = vmatpush.bf16.msra.mxu0 %v320
        %333 = vmatmul.bf16.gmra.mxu0 %v323
        %v334 = vpop.f32.mrf.mxu0
        %v335 = vadd.f32 0.0, %v334
        %v336 = vpop.f32.mrf.mxu0
        %337 = vdwg.mxu0
        %v338 = vadd.f32 %v309, %v335
        %v339 = vpack.c.bf16 %v338, %v338
        %vm340 = vcmask 519168
        %341 = vst.msk [vmem:[%s207] sm:$0xf] %vm340, %v339
        %s342 = sand.u32 %s113, 1
        %s343 = scalar_lea.sflag [#allocation4], %s342
        %s344 = sand.u32 %s113, 1
        %s345 = smul.addr %s344, 4
        %s346 = scalar_lea.vmem [#allocation5], %s345
        // Predicated region
        $region37: #{tpu_custom_call.1} parent=31 // pred_check
          %p347 = pneg %p123
        $region38: #{tpu_custom_call.1} parent=31 // pred_check_branch
          %349 = sbr.rel (%p347) target = $region40
        $region39: #{tpu_custom_call.1} parent=31 // pred_region
          %351 = vsyncadd %s343, 0
          %s352 = smul.addr %s22, 2
          %s353 = sadd.s32 %s23, %s352
          %s354 = smul.addr %s353, 4
          %s355 = scalar_lea.hbm %s3, %s354
          %s357 = sshll.u32 %s346, 4
          %s358 = int_to_ptr.vmem [resolvable:$true] %s357
          %s359 = sshll.u32 %s355, 4
          %s360 = int_to_ptr.hbm [resolvable:$true] %s359
          %362 = dma.vmem_to_hbm [thread:$0]  %s358, 64, %s360, %s343
        $region40: #{tpu_custom_call.1} parent=31 // pred_fallthru
          _
      $region32: #{tpu_custom_call.1} parent=5 // pred_fallthru
        _
      %p363 = scmp.le.s32.totalorder 2, %s13
      // Predicated region
      $region41: #{tpu_custom_call.1} parent=5 // pred_check
        %p364 = pneg %p363
      $region42: #{tpu_custom_call.1} parent=5 // pred_check_branch
        %366 = sbr.rel (%p364) target = $region44
      $region43: #{tpu_custom_call.1} parent=5 // pred_region
        %s367 = ssub.s32 %s13, 2
        // Predicated region
        $region45: #{tpu_custom_call.1} parent=43 // pred_check
          %p368 = pneg %p129
        $region46: #{tpu_custom_call.1} parent=43 // pred_check_branch
          %370 = sbr.rel (%p368) target = $region48
        $region47: #{tpu_custom_call.1} parent=43 // pred_region
          %s371 = sand.u32 %s114, 1
          %s372 = scalar_lea.sflag [#allocation4], %s371
          %s373 = sand.u32 %s114, 1
          %s374 = smul.addr %s373, 4
          %s375 = scalar_lea.vmem [#allocation5], %s374
          %377 = dma.done %s372, 64
        $region48: #{tpu_custom_call.1} parent=43 // pred_fallthru
          _
      $region44: #{tpu_custom_call.1} parent=5 // pred_fallthru
        _
    $region6: #{tpu_custom_call.1} parent=1 // loop_footer
      %s17 = sadd.s32 1, %s13
    $region7: #{tpu_custom_call.1} parent=1 // loop_footer_branch
      %12 = sbr.rel target = $region3
    $region8: #{tpu_custom_call.1} parent=1 // loop_exit
      _
    %378 = vsyncpa [#allocation3], 1
    %s379 = scalar_lea.sflag [#allocation3], 1
    %380 = vsyncpa %s379, 1
    %381 = vsyncpa [#allocation4], 1
    %s382 = scalar_lea.sflag [#allocation4], 1
    %383 = vsyncpa %s382, 1

</llo_original>
